<compile_context>
chip_gen: v5e
topology: v5e:2x2
jax: 0.10.0
libtpu: 0.0.40
codegen_flags: <defaults>
</compile_context>

<pallas_src>
import functools
import math

import jax
import jax.numpy as jnp
from jax.experimental import pallas as pl
from jax.experimental.pallas import tpu as pltpu

# ------------------------- small synthetic config ---------------------------
VOCAB = 100
HIDDEN = 32           # stands in for 768
NUM_HEADS = 4
HEAD_DIM = HIDDEN // NUM_HEADS
FFN = 4 * HIDDEN
NUM_LAYERS = 4
NUM_CLASSES = 2
MAX_POS = 64          # TODO(synk): assumes S <= 64 (pos_emb[:S]); real BERT needs 512
LN_EPS = 1e-12

_VMEM = pl.BlockSpec(memory_space=pltpu.MemorySpace.VMEM)


# ----------------------------- in-kernel helpers -----------------------------
def _bf16(x):
    # bf16 MXU operands, f32 accumulation (preferred_element_type below)
    return x.astype(jnp.bfloat16)


def _ln(y, g, b):
    mu = jnp.mean(y, axis=-1, keepdims=True)
    var = jnp.mean((y - mu) ** 2, axis=-1, keepdims=True)
    return (y - mu) * jax.lax.rsqrt(var + LN_EPS) * g + b


def _gelu(x):
    # tanh-approx GELU: tanh is a guaranteed EUP op inside Mosaic (erf is not).
    c = math.sqrt(2.0 / math.pi)
    return 0.5 * x * (1.0 + jnp.tanh(c * (x + 0.044715 * x * x * x)))


# ----------------------------- Pallas kernels --------------------------------
def _qkv_kernel(x_ref, w_ref, b_ref, o_ref):
    # Fused QKV: (N, H) @ (H, 3H) + bias   (one MXU call instead of three)
    o_ref[...] = (
        jnp.dot(_bf16(x_ref[...]), _bf16(w_ref[...]),
                preferred_element_type=jnp.float32)
        + b_ref[...]
    )


def _attn_out_kernel(x_ref, ctx_ref, wo_ref, bo_ref, g_ref, beta_ref, o_ref):
    # Fused: output projection + bias + residual + LayerNorm
    attn = jnp.dot(_bf16(ctx_ref[...]), _bf16(wo_ref[...]),
                   preferred_element_type=jnp.float32) + bo_ref[...]
    o_ref[...] = _ln(x_ref[...] + attn, g_ref[...], beta_ref[...])


def _ffn_kernel(x_ref, w1_ref, b1_ref, w2_ref, b2_ref, g_ref, beta_ref, o_ref):
    # Fused: FFN matmul 1 + bias + GELU + FFN matmul 2 + bias + residual + LayerNorm
    h = jnp.dot(_bf16(x_ref[...]), _bf16(w1_ref[...]),
                preferred_element_type=jnp.float32) + b1_ref[...]
    h = _gelu(h)
    ffn = jnp.dot(_bf16(h), _bf16(w2_ref[...]),
                  preferred_element_type=jnp.float32) + b2_ref[...]
    o_ref[...] = _ln(x_ref[...] + ffn, g_ref[...], beta_ref[...])


def _head_kernel(h1_ref, h2_ref, h3_ref, h4_ref, w_ref, o_ref):
    # Fused: concat([-1,-2,-3,-4]) -> (N, 4H=128) -> single 128-deep matmul
    # (Dropout identity in eval) -> Linear(4H, C, bias=False) -> softmax.
    hcat = jnp.concatenate(
        [h1_ref[...], h2_ref[...], h3_ref[...], h4_ref[...]], axis=-1)
    logits = jnp.dot(_bf16(hcat), _bf16(w_ref[...]),
                     preferred_element_type=jnp.float32)
    m = jnp.max(logits, axis=-1, keepdims=True)
    e = jnp.exp(logits - m)
    # exact divide keeps softmax rows summing to 1 within f32 rounding
    o_ref[...] = e / jnp.sum(e, axis=-1, keepdims=True)
    # TODO(synk): with C=2 this store is lane-sparse; pad C to 128 or emit
    # transposed if B*S grows to production sequence lengths.


def _single_block(kernel, n_in, out_shape):
    return pl.pallas_call(
        kernel,
        out_shape=out_shape,
        in_specs=[_VMEM] * n_in,
        out_specs=_VMEM,
    )


def pallas_qkv(x2d, w_qkv, b_qkv):
    N = x2d.shape[0]
    return _single_block(
        _qkv_kernel, 3, jax.ShapeDtypeStruct((N, 3 * HIDDEN), jnp.float32)
    )(x2d, w_qkv, b_qkv)


def pallas_attn_out_ln(x2d, ctx, wo, bo, g, b):
    N = x2d.shape[0]
    return _single_block(
        _attn_out_kernel, 6, jax.ShapeDtypeStruct((N, HIDDEN), jnp.float32)
    )(x2d, ctx, wo, bo, g, b)


def pallas_ffn_ln(x2d, w1, b1, w2, b2, g, b):
    N = x2d.shape[0]
    return _single_block(
        _ffn_kernel, 7, jax.ShapeDtypeStruct((N, HIDDEN), jnp.float32)
    )(x2d, w1, b1, w2, b2, g, b)


def pallas_head(h1, h2, h3, h4, w):
    N = h1.shape[0]
    return _single_block(
        _head_kernel, 5, jax.ShapeDtypeStruct((N, NUM_CLASSES), jnp.float32)
    )(h1, h2, h3, h4, w)


# --------------------------- plain-JAX glue ops ------------------------------
def layer_norm(x, gamma, beta):
    mu = jnp.mean(x, axis=-1, keepdims=True)
    var = jnp.mean((x - mu) ** 2, axis=-1, keepdims=True)
    return (x - mu) * jax.lax.rsqrt(var + LN_EPS) * gamma + beta


# --------------------------- parameter creation ------------------------------
def init_params(key):
    def nrm(k, shape, scale=0.02):
        return scale * jax.random.normal(k, shape, dtype=jnp.float32)

    keys = jax.random.split(key, 4 + NUM_LAYERS)
    params = {
        "word_emb": nrm(keys[0], (VOCAB, HIDDEN)),
        "pos_emb": nrm(keys[1], (MAX_POS, HIDDEN)),
        "emb_ln_g": jnp.ones((HIDDEN,), jnp.float32),
        "emb_ln_b": jnp.zeros((HIDDEN,), jnp.float32),
        "fc_w": nrm(keys[2], (4 * HIDDEN, NUM_CLASSES)),   # Linear(4H, C, bias=False)
        "layers": [],
    }
    for li in range(NUM_LAYERS):
        lk = jax.random.split(keys[4 + li], 8)
        # QKV weights pre-fused into a single (H, 3H) matrix; biases / LN params
        # stored as (1, dim) so they land as 2-D lane-major slabs in VMEM.
        params["layers"].append({
            "w_qkv": jnp.concatenate(
                [nrm(lk[0], (HIDDEN, HIDDEN)),
                 nrm(lk[1], (HIDDEN, HIDDEN)),
                 nrm(lk[2], (HIDDEN, HIDDEN))], axis=1),
            "b_qkv": jnp.zeros((1, 3 * HIDDEN), jnp.float32),
            "wo": nrm(lk[3], (HIDDEN, HIDDEN)),
            "bo": jnp.zeros((1, HIDDEN), jnp.float32),
            "ln1_g": jnp.ones((1, HIDDEN), jnp.float32),
            "ln1_b": jnp.zeros((1, HIDDEN), jnp.float32),
            "w1": nrm(lk[4], (HIDDEN, FFN)),
            "b1": jnp.zeros((1, FFN), jnp.float32),
            "w2": nrm(lk[5], (FFN, HIDDEN)),
            "b2": jnp.zeros((1, HIDDEN), jnp.float32),
            "ln2_g": jnp.ones((1, HIDDEN), jnp.float32),
            "ln2_b": jnp.zeros((1, HIDDEN), jnp.float32),
        })
    return params


# ----------------------------- model forward ---------------------------------
def encoder_layer(x, attn_bias, p):
    B, S, H = x.shape
    N = B * S
    x2d = x.reshape(N, H)

    # 1 fused Pallas call: QKV projection (+bias)
    qkv = pallas_qkv(x2d, p["w_qkv"], p["b_qkv"])         # (N, 3H)
    qkv = qkv.reshape(B, S, 3, NUM_HEADS, HEAD_DIM)
    q, k, v = qkv[:, :, 0], qkv[:, :, 1], qkv[:, :, 2]

    # TODO(synk): at real seq lengths this block should be a fused
    # flash-attention Pallas kernel (online softmax, KV tiles); at S=8 the
    # materialized score tensor is tiny so plain-JAX einsums are used.
    scores = jnp.einsum("bqhd,bkhd->bhqk", q, k) / jnp.sqrt(float(HEAD_DIM))
    probs = jax.nn.softmax(scores + attn_bias, axis=-1)    # mask add stays f32
    ctx = jnp.einsum("bhqk,bkhd->bqhd", probs, v).reshape(N, H)

    # 1 fused Pallas call: out-proj + bias + residual + LayerNorm
    x2d = pallas_attn_out_ln(x2d, ctx, p["wo"], p["bo"], p["ln1_g"], p["ln1_b"])

    # 1 fused Pallas call: FFN matmul + GELU + FFN matmul + residual + LayerNorm
    x2d = pallas_ffn_ln(x2d, p["w1"], p["b1"], p["w2"], p["b2"],
                        p["ln2_g"], p["ln2_b"])
    return x2d.reshape(B, S, H)


def my_model_forward(params, input_ids, attn_masks):
    B, S = input_ids.shape
    # embeddings (word + position, token_type assumed all-zero) + LayerNorm
    x = params["word_emb"][input_ids] + params["pos_emb"][:S][None, :, :]
    x = layer_norm(x, params["emb_ln_g"], params["emb_ln_b"])

    attn_bias = (1.0 - attn_masks.astype(jnp.float32))[:, None, None, :] * (-1e9)

    hidden_states = [x]  # outputs.hidden_states[0] = embedding output
    for p in params["layers"]:
        x = encoder_layer(x, attn_bias, p)
        hidden_states.append(x)

    # torch.cat([h[-1], h[-2], h[-3], h[-4]], dim=-1) -> Dropout (identity, eval)
    # -> Linear(4H, C, bias=False) -> softmax(dim=-1): fused in one Pallas kernel.
    N = B * S
    h1 = hidden_states[-1].reshape(N, HIDDEN)
    h2 = hidden_states[-2].reshape(N, HIDDEN)
    h3 = hidden_states[-3].reshape(N, HIDDEN)
    h4 = hidden_states[-4].reshape(N, HIDDEN)
    probs = pallas_head(h1, h2, h3, h4, params["fc_w"])
    return probs.reshape(B, S, NUM_CLASSES)


# ----------------------------------- main ------------------------------------
if __name__ == "__main__":
    key = jax.random.PRNGKey(0)
    k_params, k_ids = jax.random.split(key)

    B, S = 2, 8
    params = init_params(k_params)
    input_ids = jax.random.randint(k_ids, (B, S), 0, VOCAB, dtype=jnp.int32)
    attn_masks = jnp.ones((B, S), dtype=jnp.int32).at[:, -2:].set(0)  # pad last 2 tokens

    fwd = jax.jit(functools.partial(my_model_forward, params))
    probs = fwd(input_ids, attn_masks)
    jax.block_until_ready(probs)

    assert probs.shape == (B, S, NUM_CLASSES)
    # softmax rows must sum to 1
    assert jnp.allclose(jnp.sum(probs, axis=-1), 1.0, atol=1e-5)
    print("KERNEL_OK")
</pallas_src>

<mosaic_0001>
module attributes {stable_mosaic.version = 11 : i64} {
  func.func @_qkv_kernel(%arg0: memref<16x32xf32, #tpu.memory_space<vmem>>, %arg1: memref<32x96xf32, #tpu.memory_space<vmem>>, %arg2: memref<1x96xf32, #tpu.memory_space<vmem>>, %arg3: memref<16x96xf32, #tpu.memory_space<vmem>>) attributes {dimension_semantics = [], scalar_prefetch = 0 : i64, scratch_operands = 0 : i64, tpu.core_type = #tpu.core_type<tc>} {
    %c0 = arith.constant 0 : index
    %c0_0 = arith.constant 0 : index
    %0 = vector.load %arg0[%c0, %c0_0] : memref<16x32xf32, #tpu.memory_space<vmem>>, vector<16x32xf32>
    %1 = arith.truncf %0 : vector<16x32xf32> to vector<16x32xbf16>
    %c0_1 = arith.constant 0 : index
    %c0_2 = arith.constant 0 : index
    %2 = vector.load %arg1[%c0_1, %c0_2] : memref<32x96xf32, #tpu.memory_space<vmem>>, vector<32x96xf32>
    %3 = arith.truncf %2 : vector<32x96xf32> to vector<32x96xbf16>
    %cst = arith.constant dense<0.000000e+00> : vector<16x96xf32>
    %4 = tpu.matmul %1, %3, %cst {dimension_numbers = #tpu.dot_dimension_numbers<[1], [0], [0], [1], [0, 0, 1, 1], [], []>} : vector<16x32xbf16>, vector<32x96xbf16>, vector<16x96xf32> -> vector<16x96xf32>
    %c0_3 = arith.constant 0 : index
    %c0_4 = arith.constant 0 : index
    %5 = vector.load %arg2[%c0_3, %c0_4] : memref<1x96xf32, #tpu.memory_space<vmem>>, vector<1x96xf32>
    %6 = vector.broadcast %5 : vector<1x96xf32> to vector<16x96xf32>
    %7 = arith.addf %4, %6 : vector<16x96xf32>
    %c0_5 = arith.constant 0 : index
    %c0_6 = arith.constant 0 : index
    %8 = vector.load %arg3[%c0_5, %c0_6] : memref<16x96xf32, #tpu.memory_space<vmem>>, vector<16x96xf32>
    tpu.vector_store %arg3[%c0_5, %c0_6], %7 {strides = array<i32>} : memref<16x96xf32, #tpu.memory_space<vmem>>, vector<16x96xf32>,
    return
  }
}

module attributes {stable_mosaic.version = 11 : i64} {
  func.func @_attn_out_kernel(%arg0: memref<16x32xf32, #tpu.memory_space<vmem>>, %arg1: memref<16x32xf32, #tpu.memory_space<vmem>>, %arg2: memref<32x32xf32, #tpu.memory_space<vmem>>, %arg3: memref<1x32xf32, #tpu.memory_space<vmem>>, %arg4: memref<1x32xf32, #tpu.memory_space<vmem>>, %arg5: memref<1x32xf32, #tpu.memory_space<vmem>>, %arg6: memref<16x32xf32, #tpu.memory_space<vmem>>) attributes {dimension_semantics = [], scalar_prefetch = 0 : i64, scratch_operands = 0 : i64, tpu.core_type = #tpu.core_type<tc>} {
    %c0 = arith.constant 0 : index
    %c0_0 = arith.constant 0 : index
    %0 = vector.load %arg1[%c0, %c0_0] : memref<16x32xf32, #tpu.memory_space<vmem>>, vector<16x32xf32>
    %1 = arith.truncf %0 : vector<16x32xf32> to vector<16x32xbf16>
    %c0_1 = arith.constant 0 : index
    %c0_2 = arith.constant 0 : index
    %2 = vector.load %arg2[%c0_1, %c0_2] : memref<32x32xf32, #tpu.memory_space<vmem>>, vector<32x32xf32>
    %3 = arith.truncf %2 : vector<32x32xf32> to vector<32x32xbf16>
    %cst = arith.constant dense<0.000000e+00> : vector<16x32xf32>
    %4 = tpu.matmul %1, %3, %cst {dimension_numbers = #tpu.dot_dimension_numbers<[1], [0], [0], [1], [0, 0, 1, 1], [], []>} : vector<16x32xbf16>, vector<32x32xbf16>, vector<16x32xf32> -> vector<16x32xf32>
    %c0_3 = arith.constant 0 : index
    %c0_4 = arith.constant 0 : index
    %5 = vector.load %arg3[%c0_3, %c0_4] : memref<1x32xf32, #tpu.memory_space<vmem>>, vector<1x32xf32>
    %6 = vector.broadcast %5 : vector<1x32xf32> to vector<16x32xf32>
    %7 = arith.addf %4, %6 : vector<16x32xf32>
    %c0_5 = arith.constant 0 : index
    %c0_6 = arith.constant 0 : index
    %8 = vector.load %arg0[%c0_5, %c0_6] : memref<16x32xf32, #tpu.memory_space<vmem>>, vector<16x32xf32>
    %9 = arith.addf %8, %7 : vector<16x32xf32>
    %c0_7 = arith.constant 0 : index
    %c0_8 = arith.constant 0 : index
    %10 = vector.load %arg4[%c0_7, %c0_8] : memref<1x32xf32, #tpu.memory_space<vmem>>, vector<1x32xf32>
    %c0_9 = arith.constant 0 : index
    %c0_10 = arith.constant 0 : index
    %11 = vector.load %arg5[%c0_9, %c0_10] : memref<1x32xf32, #tpu.memory_space<vmem>>, vector<1x32xf32>
    %cst_11 = arith.constant dense<0.000000e+00> : vector<16xf32>
    %12 = vector.multi_reduction <add>, %9, %cst_11 [1] : vector<16x32xf32> to vector<16xf32>
    %13 = vector.shape_cast %12 : vector<16xf32> to vector<16x1xf32>
    %cst_12 = arith.constant 3.200000e+01 : f32
    %14 = vector.broadcast %cst_12 : f32 to vector<16x1xf32>
    %15 = arith.divf %13, %14 : vector<16x1xf32>
    %16 = vector.broadcast %15 : vector<16x1xf32> to vector<16x32xf32>
    %17 = arith.subf %9, %16 : vector<16x32xf32>
    %18 = arith.mulf %17, %17 : vector<16x32xf32>
    %cst_13 = arith.constant dense<0.000000e+00> : vector<16xf32>
    %19 = vector.multi_reduction <add>, %18, %cst_13 [1] : vector<16x32xf32> to vector<16xf32>
    %20 = vector.shape_cast %19 : vector<16xf32> to vector<16x1xf32>
    %cst_14 = arith.constant 3.200000e+01 : f32
    %21 = vector.broadcast %cst_14 : f32 to vector<16x1xf32>
    %22 = arith.divf %20, %21 : vector<16x1xf32>
    %23 = vector.broadcast %15 : vector<16x1xf32> to vector<16x32xf32>
    %24 = arith.subf %9, %23 : vector<16x32xf32>
    %cst_15 = arith.constant 9.99999996E-13 : f32
    %25 = vector.broadcast %cst_15 : f32 to vector<16x1xf32>
    %26 = arith.addf %22, %25 : vector<16x1xf32>
    %27 = math.rsqrt %26 : vector<16x1xf32>
    %28 = vector.broadcast %27 : vector<16x1xf32> to vector<16x32xf32>
    %29 = arith.mulf %24, %28 : vector<16x32xf32>
    %30 = vector.broadcast %10 : vector<1x32xf32> to vector<16x32xf32>
    %31 = arith.mulf %29, %30 : vector<16x32xf32>
    %32 = vector.broadcast %11 : vector<1x32xf32> to vector<16x32xf32>
    %33 = arith.addf %31, %32 : vector<16x32xf32>
    %c0_16 = arith.constant 0 : index
    %c0_17 = arith.constant 0 : index
    %34 = vector.load %arg6[%c0_16, %c0_17] : memref<16x32xf32, #tpu.memory_space<vmem>>, vector<16x32xf32>
    tpu.vector_store %arg6[%c0_16, %c0_17], %33 {strides = array<i32>} : memref<16x32xf32, #tpu.memory_space<vmem>>, vector<16x32xf32>,
    return
  }
}

module attributes {stable_mosaic.version = 11 : i64} {
  func.func @_head_kernel(%arg0: memref<16x32xf32, #tpu.memory_space<vmem>>, %arg1: memref<16x32xf32, #tpu.memory_space<vmem>>, %arg2: memref<16x32xf32, #tpu.memory_space<vmem>>, %arg3: memref<16x32xf32, #tpu.memory_space<vmem>>, %arg4: memref<128x2xf32, #tpu.memory_space<vmem>>, %arg5: memref<16x2xf32, #tpu.memory_space<vmem>>) attributes {dimension_semantics = [], scalar_prefetch = 0 : i64, scratch_operands = 0 : i64, tpu.core_type = #tpu.core_type<tc>} {
    %c0 = arith.constant 0 : index
    %c0_0 = arith.constant 0 : index
    %0 = vector.load %arg0[%c0, %c0_0] : memref<16x32xf32, #tpu.memory_space<vmem>>, vector<16x32xf32>
    %c0_1 = arith.constant 0 : index
    %c0_2 = arith.constant 0 : index
    %1 = vector.load %arg1[%c0_1, %c0_2] : memref<16x32xf32, #tpu.memory_space<vmem>>, vector<16x32xf32>
    %c0_3 = arith.constant 0 : index
    %c0_4 = arith.constant 0 : index
    %2 = vector.load %arg2[%c0_3, %c0_4] : memref<16x32xf32, #tpu.memory_space<vmem>>, vector<16x32xf32>
    %c0_5 = arith.constant 0 : index
    %c0_6 = arith.constant 0 : index
    %3 = vector.load %arg3[%c0_5, %c0_6] : memref<16x32xf32, #tpu.memory_space<vmem>>, vector<16x32xf32>
    %4 = tpu.concatenate %0, %1, %2, %3 in 1 : vector<16x32xf32>, vector<16x32xf32>, vector<16x32xf32>, vector<16x32xf32> -> vector<16x128xf32>
    %5 = arith.truncf %4 : vector<16x128xf32> to vector<16x128xbf16>
    %c0_7 = arith.constant 0 : index
    %c0_8 = arith.constant 0 : index
    %6 = vector.load %arg4[%c0_7, %c0_8] : memref<128x2xf32, #tpu.memory_space<vmem>>, vector<128x2xf32>
    %7 = arith.truncf %6 : vector<128x2xf32> to vector<128x2xbf16>
    %cst = arith.constant dense<0.000000e+00> : vector<16x2xf32>
    %8 = tpu.matmul %5, %7, %cst {dimension_numbers = #tpu.dot_dimension_numbers<[1], [0], [0], [1], [0, 0, 1, 1], [], []>} : vector<16x128xbf16>, vector<128x2xbf16>, vector<16x2xf32> -> vector<16x2xf32>
    %cst_9 = arith.constant dense<0xFF800000> : vector<16xf32>
    %9 = vector.multi_reduction <maximumf>, %8, %cst_9 [1] : vector<16x2xf32> to vector<16xf32>
    %10 = vector.shape_cast %9 : vector<16xf32> to vector<16x1xf32>
    %11 = vector.broadcast %10 : vector<16x1xf32> to vector<16x2xf32>
    %12 = arith.subf %8, %11 : vector<16x2xf32>
    %13 = math.exp %12 : vector<16x2xf32>
    %cst_10 = arith.constant dense<0.000000e+00> : vector<16xf32>
    %14 = vector.multi_reduction <add>, %13, %cst_10 [1] : vector<16x2xf32> to vector<16xf32>
    %15 = vector.shape_cast %14 : vector<16xf32> to vector<16x1xf32>
    %16 = vector.broadcast %15 : vector<16x1xf32> to vector<16x2xf32>
    %17 = arith.divf %13, %16 : vector<16x2xf32>
    %c0_11 = arith.constant 0 : index
    %c0_12 = arith.constant 0 : index
    %18 = vector.load %arg5[%c0_11, %c0_12] : memref<16x2xf32, #tpu.memory_space<vmem>>, vector<16x2xf32>
    tpu.vector_store %arg5[%c0_11, %c0_12], %17 {strides = array<i32>} : memref<16x2xf32, #tpu.memory_space<vmem>>, vector<16x2xf32>,
    return
  }
}

module attributes {stable_mosaic.version = 11 : i64} {
  func.func @_ffn_kernel(%arg0: memref<16x32xf32, #tpu.memory_space<vmem>>, %arg1: memref<32x128xf32, #tpu.memory_space<vmem>>, %arg2: memref<1x128xf32, #tpu.memory_space<vmem>>, %arg3: memref<128x32xf32, #tpu.memory_space<vmem>>, %arg4: memref<1x32xf32, #tpu.memory_space<vmem>>, %arg5: memref<1x32xf32, #tpu.memory_space<vmem>>, %arg6: memref<1x32xf32, #tpu.memory_space<vmem>>, %arg7: memref<16x32xf32, #tpu.memory_space<vmem>>) attributes {dimension_semantics = [], scalar_prefetch = 0 : i64, scratch_operands = 0 : i64, tpu.core_type = #tpu.core_type<tc>} {
    %c0 = arith.constant 0 : index
    %c0_0 = arith.constant 0 : index
    %0 = vector.load %arg0[%c0, %c0_0] : memref<16x32xf32, #tpu.memory_space<vmem>>, vector<16x32xf32>
    %1 = arith.truncf %0 : vector<16x32xf32> to vector<16x32xbf16>
    %c0_1 = arith.constant 0 : index
    %c0_2 = arith.constant 0 : index
    %2 = vector.load %arg1[%c0_1, %c0_2] : memref<32x128xf32, #tpu.memory_space<vmem>>, vector<32x128xf32>
    %3 = arith.truncf %2 : vector<32x128xf32> to vector<32x128xbf16>
    %cst = arith.constant dense<0.000000e+00> : vector<16x128xf32>
    %4 = tpu.matmul %1, %3, %cst {dimension_numbers = #tpu.dot_dimension_numbers<[1], [0], [0], [1], [0, 0, 1, 1], [], []>} : vector<16x32xbf16>, vector<32x128xbf16>, vector<16x128xf32> -> vector<16x128xf32>
    %c0_3 = arith.constant 0 : index
    %c0_4 = arith.constant 0 : index
    %5 = vector.load %arg2[%c0_3, %c0_4] : memref<1x128xf32, #tpu.memory_space<vmem>>, vector<1x128xf32>
    %6 = vector.broadcast %5 : vector<1x128xf32> to vector<16x128xf32>
    %7 = arith.addf %4, %6 : vector<16x128xf32>
    %cst_5 = arith.constant 5.000000e-01 : f32
    %8 = vector.broadcast %cst_5 : f32 to vector<16x128xf32>
    %9 = arith.mulf %8, %7 : vector<16x128xf32>
    %cst_6 = arith.constant 4.471500e-02 : f32
    %10 = vector.broadcast %cst_6 : f32 to vector<16x128xf32>
    %11 = arith.mulf %10, %7 : vector<16x128xf32>
    %12 = arith.mulf %11, %7 : vector<16x128xf32>
    %13 = arith.mulf %12, %7 : vector<16x128xf32>
    %14 = arith.addf %7, %13 : vector<16x128xf32>
    %cst_7 = arith.constant 0.797884583 : f32
    %15 = vector.broadcast %cst_7 : f32 to vector<16x128xf32>
    %16 = arith.mulf %15, %14 : vector<16x128xf32>
    %17 = math.tanh %16 : vector<16x128xf32>
    %cst_8 = arith.constant 1.000000e+00 : f32
    %18 = vector.broadcast %cst_8 : f32 to vector<16x128xf32>
    %19 = arith.addf %18, %17 : vector<16x128xf32>
    %20 = arith.mulf %9, %19 : vector<16x128xf32>
    %21 = arith.truncf %20 : vector<16x128xf32> to vector<16x128xbf16>
    %c0_9 = arith.constant 0 : index
    %c0_10 = arith.constant 0 : index
    %22 = vector.load %arg3[%c0_9, %c0_10] : memref<128x32xf32, #tpu.memory_space<vmem>>, vector<128x32xf32>
    %23 = arith.truncf %22 : vector<128x32xf32> to vector<128x32xbf16>
    %cst_11 = arith.constant dense<0.000000e+00> : vector<16x32xf32>
    %24 = tpu.matmul %21, %23, %cst_11 {dimension_numbers = #tpu.dot_dimension_numbers<[1], [0], [0], [1], [0, 0, 1, 1], [], []>} : vector<16x128xbf16>, vector<128x32xbf16>, vector<16x32xf32> -> vector<16x32xf32>
    %c0_12 = arith.constant 0 : index
    %c0_13 = arith.constant 0 : index
    %25 = vector.load %arg4[%c0_12, %c0_13] : memref<1x32xf32, #tpu.memory_space<vmem>>, vector<1x32xf32>
    %26 = vector.broadcast %25 : vector<1x32xf32> to vector<16x32xf32>
    %27 = arith.addf %24, %26 : vector<16x32xf32>
    %c0_14 = arith.constant 0 : index
    %c0_15 = arith.constant 0 : index
    %28 = vector.load %arg0[%c0_14, %c0_15] : memref<16x32xf32, #tpu.memory_space<vmem>>, vector<16x32xf32>
    %29 = arith.addf %28, %27 : vector<16x32xf32>
    %c0_16 = arith.constant 0 : index
    %c0_17 = arith.constant 0 : index
    %30 = vector.load %arg5[%c0_16, %c0_17] : memref<1x32xf32, #tpu.memory_space<vmem>>, vector<1x32xf32>
    %c0_18 = arith.constant 0 : index
    %c0_19 = arith.constant 0 : index
    %31 = vector.load %arg6[%c0_18, %c0_19] : memref<1x32xf32, #tpu.memory_space<vmem>>, vector<1x32xf32>
    %cst_20 = arith.constant dense<0.000000e+00> : vector<16xf32>
    %32 = vector.multi_reduction <add>, %29, %cst_20 [1] : vector<16x32xf32> to vector<16xf32>
    %33 = vector.shape_cast %32 : vector<16xf32> to vector<16x1xf32>
    %cst_21 = arith.constant 3.200000e+01 : f32
    %34 = vector.broadcast %cst_21 : f32 to vector<16x1xf32>
    %35 = arith.divf %33, %34 : vector<16x1xf32>
    %36 = vector.broadcast %35 : vector<16x1xf32> to vector<16x32xf32>
    %37 = arith.subf %29, %36 : vector<16x32xf32>
    %38 = arith.mulf %37, %37 : vector<16x32xf32>
    %cst_22 = arith.constant dense<0.000000e+00> : vector<16xf32>
    %39 = vector.multi_reduction <add>, %38, %cst_22 [1] : vector<16x32xf32> to vector<16xf32>
    %40 = vector.shape_cast %39 : vector<16xf32> to vector<16x1xf32>
    %cst_23 = arith.constant 3.200000e+01 : f32
    %41 = vector.broadcast %cst_23 : f32 to vector<16x1xf32>
    %42 = arith.divf %40, %41 : vector<16x1xf32>
    %43 = vector.broadcast %35 : vector<16x1xf32> to vector<16x32xf32>
    %44 = arith.subf %29, %43 : vector<16x32xf32>
    %cst_24 = arith.constant 9.99999996E-13 : f32
    %45 = vector.broadcast %cst_24 : f32 to vector<16x1xf32>
    %46 = arith.addf %42, %45 : vector<16x1xf32>
    %47 = math.rsqrt %46 : vector<16x1xf32>
    %48 = vector.broadcast %47 : vector<16x1xf32> to vector<16x32xf32>
    %49 = arith.mulf %44, %48 : vector<16x32xf32>
    %50 = vector.broadcast %30 : vector<1x32xf32> to vector<16x32xf32>
    %51 = arith.mulf %49, %50 : vector<16x32xf32>
    %52 = vector.broadcast %31 : vector<1x32xf32> to vector<16x32xf32>
    %53 = arith.addf %51, %52 : vector<16x32xf32>
    %c0_25 = arith.constant 0 : index
    %c0_26 = arith.constant 0 : index
    %54 = vector.load %arg7[%c0_25, %c0_26] : memref<16x32xf32, #tpu.memory_space<vmem>>, vector<16x32xf32>
    tpu.vector_store %arg7[%c0_25, %c0_26], %53 {strides = array<i32>} : memref<16x32xf32, #tpu.memory_space<vmem>>, vector<16x32xf32>,
    return
  }
}

</mosaic_0001>

<llo_original>
// kernel: my_model_forward.13
$region0: #{my_model_forward.13}
  #allocation0 [shape = 'u32[]', space=smem, size = 0x4, offset = 0x4, fixed_abs, tag = 'smem constant byte address 0x4 - core index']
  #allocation1 [shape = 'u32[72,128]{1,0:T(1,128)}', space=vmem, size = 0x9000, scoped, tag = 'internal scratch']
  %s0 = inlined_call_operand.vmem [shape: f32[16,32], index: 0, kind: input, shape index: {}]
  %s1 = inlined_call_operand.vmem [shape: f32[32,96], index: 1, kind: input, shape index: {}]
  %s2 = inlined_call_operand.vmem [shape: f32[1,96], index: 2, kind: input, shape index: {}]
  %s3 = inlined_call_operand.vmem [shape: f32[16,96], index: 3, kind: output, shape index: {}]
  %s4 = sld [smem:[#allocation0]]
  $region22: #{my_model_forward.13} parent=0
    _
  %s6 = ssub.s32 1, %s4
  %s7 = scalar_select 0, %s6, %s4
  // Predicated region
  $region2: #{my_model_forward.13} parent=0 // pred_check
    _
  $region3: #{my_model_forward.13} parent=0 // pred_check_branch
    %9 = sbr.rel (0) target = $region5
  $region4: #{my_model_forward.13} parent=0 // pred_region
    _
  $region5: #{my_model_forward.13} parent=0 // pred_fallthru
    _
  // Predicated region
  $region6: #{my_model_forward.13} parent=0 // pred_check
    _
  $region7: #{my_model_forward.13} parent=0 // pred_check_branch
    %11 = sbr.rel (0) target = $region9
  $region8: #{my_model_forward.13} parent=0 // pred_region
    _
  $region9: #{my_model_forward.13} parent=0 // pred_fallthru
    _
  // Predicated region
  $region10: #{my_model_forward.13} parent=0 // pred_check
    _
  $region11: #{my_model_forward.13} parent=0 // pred_check_branch
    %13 = sbr.rel (0) target = $region13
  $region12: #{my_model_forward.13} parent=0 // pred_region
    _
  $region13: #{my_model_forward.13} parent=0 // pred_fallthru
    _
  %v15 = vld [vmem:[%s0] sm:$0xff]
  %v16 = vld [vmem:[%s0 + $0x8] sm:$0xff]
  %v17 = vpack.c.bf16 %v16, %v15
  %v18 = vld [vmem:[%s1] sm:$0xff]
  %v19 = vld [vmem:[%s1 + $0x8] sm:$0xff]
  %v20 = vld [vmem:[%s1 + $0x10] sm:$0xff]
  %v21 = vld [vmem:[%s1 + $0x18] sm:$0xff]
  %v22 = vpack.c.bf16 %v19, %v18
  %v23 = vpack.c.bf16 %v21, %v20
  %v24 = vld [vmem:[%s2] sm:$0x1]
  %v26 = vperm.slane %v24, 0
  %vm28 = vcmask 261120
  %v30 = vsel %vm28, %v17, 0
  %32 = vmatpush.bf16.msra.mxu0 0
  %33 = vmatpush.bf16.msra.mxu0 0
  %34 = vmatpush.bf16.msra.mxu0 0
  %35 = vmatpush.bf16.msra.mxu0 0
  %36 = vmatpush.bf16.msra.mxu0 0
  %37 = vmatpush.bf16.msra.mxu0 0
  %38 = vmatpush.bf16.msra.mxu0 %v23
  %39 = vmatpush.bf16.msra.mxu0 %v22
  %40 = vmatmul.bf16.gmra.mxu0 %v30
  %v41 = vpop.f32.mrf.mxu0
  %v42 = vadd.f32 %v26, %v41
  %v43 = vpop.f32.mrf.mxu0
  %v44 = vadd.f32 %v26, %v43
  %45 = vdwg.mxu0
  %vm46 = vcmask 785408
  %47 = vst.msk [vmem:[%s3] sm:$0xff] %vm46, %v42
  %48 = vst.msk [vmem:[%s3 + $0x8] sm:$0xff] %vm46, %v44
  // Predicated region
  $region14: #{my_model_forward.13} parent=0 // pred_check
    _
  $region15: #{my_model_forward.13} parent=0 // pred_check_branch
    %50 = sbr.rel (0) target = $region17
  $region16: #{my_model_forward.13} parent=0 // pred_region
    _
  $region17: #{my_model_forward.13} parent=0 // pred_fallthru
    _
  // Predicated region
  $region18: #{my_model_forward.13} parent=0 // pred_check
    _
  $region19: #{my_model_forward.13} parent=0 // pred_check_branch
    %52 = sbr.rel (0) target = $region21
  $region20: #{my_model_forward.13} parent=0 // pred_region
    _
  $region21: #{my_model_forward.13} parent=0 // pred_fallthru
    _

// kernel: my_model_forward.14
$region0: #{my_model_forward.14}
  #allocation0 [shape = 'u32[]', space=smem, size = 0x4, offset = 0x4, fixed_abs, tag = 'smem constant byte address 0x4 - core index']
  #allocation1 [shape = 'u32[72,128]{1,0:T(1,128)}', space=vmem, size = 0x9000, scoped, tag = 'internal scratch']
  %s0 = inlined_call_operand.vmem [shape: f32[16,32], index: 0, kind: input, shape index: {}]
  %s1 = inlined_call_operand.vmem [shape: f32[16,32], index: 1, kind: input, shape index: {}]
  %s2 = inlined_call_operand.vmem [shape: f32[32,32], index: 2, kind: input, shape index: {}]
  %s3 = inlined_call_operand.vmem [shape: f32[1,32], index: 3, kind: input, shape index: {}, may-alias: {3,5}]
  %s4 = inlined_call_operand.vmem [shape: f32[1,32], index: 4, kind: input, shape index: {}]
  %s5 = inlined_call_operand.vmem [shape: f32[1,32], index: 5, kind: input, shape index: {}, may-alias: {3,5}]
  %s6 = inlined_call_operand.vmem [shape: f32[16,32], index: 6, kind: output, shape index: {}]
  %s7 = sld [smem:[#allocation0]]
  $region34: #{my_model_forward.14} parent=0
    _
  %s9 = ssub.s32 1, %s7
  %s10 = scalar_select 0, %s9, %s7
  // Predicated region
  $region2: #{my_model_forward.14} parent=0 // pred_check
    _
  $region3: #{my_model_forward.14} parent=0 // pred_check_branch
    %12 = sbr.rel (0) target = $region5
  $region4: #{my_model_forward.14} parent=0 // pred_region
    _
  $region5: #{my_model_forward.14} parent=0 // pred_fallthru
    _
  // Predicated region
  $region6: #{my_model_forward.14} parent=0 // pred_check
    _
  $region7: #{my_model_forward.14} parent=0 // pred_check_branch
    %14 = sbr.rel (0) target = $region9
  $region8: #{my_model_forward.14} parent=0 // pred_region
    _
  $region9: #{my_model_forward.14} parent=0 // pred_fallthru
    _
  // Predicated region
  $region10: #{my_model_forward.14} parent=0 // pred_check
    _
  $region11: #{my_model_forward.14} parent=0 // pred_check_branch
    %16 = sbr.rel (0) target = $region13
  $region12: #{my_model_forward.14} parent=0 // pred_region
    _
  $region13: #{my_model_forward.14} parent=0 // pred_fallthru
    _
  // Predicated region
  $region14: #{my_model_forward.14} parent=0 // pred_check
    _
  $region15: #{my_model_forward.14} parent=0 // pred_check_branch
    %18 = sbr.rel (0) target = $region17
  $region16: #{my_model_forward.14} parent=0 // pred_region
    _
  $region17: #{my_model_forward.14} parent=0 // pred_fallthru
    _
  // Predicated region
  $region18: #{my_model_forward.14} parent=0 // pred_check
    _
  $region19: #{my_model_forward.14} parent=0 // pred_check_branch
    %20 = sbr.rel (0) target = $region21
  $region20: #{my_model_forward.14} parent=0 // pred_region
    _
  $region21: #{my_model_forward.14} parent=0 // pred_fallthru
    _
  // Predicated region
  $region22: #{my_model_forward.14} parent=0 // pred_check
    _
  $region23: #{my_model_forward.14} parent=0 // pred_check_branch
    %22 = sbr.rel (0) target = $region25
  $region24: #{my_model_forward.14} parent=0 // pred_region
    _
  $region25: #{my_model_forward.14} parent=0 // pred_fallthru
    _
  %v24 = vld [vmem:[%s1] sm:$0xff]
  %v25 = vld [vmem:[%s1 + $0x8] sm:$0xff]
  %v26 = vpack.c.bf16 %v25, %v24
  %v27 = vld [vmem:[%s2] sm:$0xff]
  %v28 = vld [vmem:[%s2 + $0x8] sm:$0xff]
  %v29 = vld [vmem:[%s2 + $0x10] sm:$0xff]
  %v30 = vld [vmem:[%s2 + $0x18] sm:$0xff]
  %v31 = vpack.c.bf16 %v28, %v27
  %v32 = vpack.c.bf16 %v30, %v29
  %v33 = vld [vmem:[%s3] sm:$0x1]
  %v35 = vperm.slane %v33, 0
  %vm37 = vcmask 261120
  %v39 = vsel %vm37, %v26, 0
  %41 = vmatpush.bf16.msra.mxu0 0
  %42 = vmatpush.bf16.msra.mxu0 0
  %43 = vmatpush.bf16.msra.mxu0 0
  %44 = vmatpush.bf16.msra.mxu0 0
  %45 = vmatpush.bf16.msra.mxu0 0
  %46 = vmatpush.bf16.msra.mxu0 0
  %47 = vmatpush.bf16.msra.mxu0 %v32
  %48 = vmatpush.bf16.msra.mxu0 %v31
  %49 = vmatmul.bf16.gmra.mxu0 %v39
  %v50 = vpop.f32.mrf.mxu0
  %v51 = vadd.f32 %v35, %v50
  %v52 = vpop.f32.mrf.mxu0
  %v53 = vadd.f32 %v35, %v52
  %54 = vdwg.mxu0
  %v55 = vld [vmem:[%s0] sm:$0xff]
  %v56 = vld [vmem:[%s0 + $0x8] sm:$0xff]
  %v57 = vadd.f32 %v55, %v51
  %v58 = vadd.f32 %v56, %v53
  %v59 = vld [vmem:[%s4] sm:$0x1]
  %v60 = vld [vmem:[%s5] sm:$0x1]
  %v61 = vsel %vm37, %v57, 0.0
  %62 = vadd.xlane.f32.xlu0 %v61
  %v63 = vpop.xlane.xlu0 %62
  %v64 = vsel %vm37, %v58, 0.0
  %65 = vadd.xlane.f32.xlu0 %v64
  %v66 = vpop.xlane.xlu0 %65
  %v67 = vrcp.pop 32.0
  %v68 = vmul.f32 32.0, %v67
  %v69 = vsub.f32 1.0, %v68
  %v70 = vmul.f32 %v67, %v69
  %v71 = vadd.f32 %v67, %v70
  %vm72 = vweird.f32 %v67
  %v73 = vsel %vm72, %v67, %v71
  %v74 = vmul.f32 %v63, %v73
  %v75 = vmul.f32 %v66, %v73
  %v76 = vsub.f32 %v57, %v74
  %v77 = vsub.f32 %v58, %v75
  %v78 = vmul.f32 %v76, %v76
  %v79 = vmul.f32 %v77, %v77
  %v80 = vsel %vm37, %v78, 0.0
  %81 = vadd.xlane.f32.xlu0 %v80
  %v82 = vpop.xlane.xlu0 %81
  %v83 = vsel %vm37, %v79, 0.0
  %84 = vadd.xlane.f32.xlu0 %v83
  %v85 = vpop.xlane.xlu0 %84
  %v86 = vmul.f32 %v82, %v73
  %v87 = vmul.f32 %v85, %v73
  %v88 = vadd.f32 %v86, 1e-12
  %v89 = vadd.f32 %v87, 1e-12
  %v90 = vrsqrt.pop %v88
  %v91 = vmul.f32 %v90, %v88
  %v92 = vmul.f32 %v91, %v90
  %v93 = vmul.f32 0.5, %v92
  %v94 = vsub.f32 1.5, %v93
  %v95 = vmul.f32 %v90, %v94
  %vm96 = vweird.f32 %v88
  %vm97 = vweird.f32 %v90
  %vm98 = vmor %vm96, %vm97
  %v99 = vsel %vm98, %v90, %v95
  %v100 = vrsqrt.pop %v89
  %v101 = vmul.f32 %v100, %v89
  %v102 = vmul.f32 %v101, %v100
  %v103 = vmul.f32 0.5, %v102
  %v104 = vsub.f32 1.5, %v103
  %v105 = vmul.f32 %v100, %v104
  %vm106 = vweird.f32 %v89
  %vm107 = vweird.f32 %v100
  %vm108 = vmor %vm106, %vm107
  %v109 = vsel %vm108, %v100, %v105
  %v110 = vmul.f32 %v76, %v99
  %v111 = vmul.f32 %v77, %v109
  %v113 = vperm.slane %v59, 0
  %v115 = vmul.f32 %v110, %v113
  %v116 = vmul.f32 %v111, %v113
  %v118 = vperm.slane %v60, 0
  %v120 = vadd.f32 %v115, %v118
  %v121 = vadd.f32 %v116, %v118
  %122 = vst.msk [vmem:[%s6] sm:$0xff] %vm37, %v120
  %123 = vst.msk [vmem:[%s6 + $0x8] sm:$0xff] %vm37, %v121
  // Predicated region
  $region26: #{my_model_forward.14} parent=0 // pred_check
    _
  $region27: #{my_model_forward.14} parent=0 // pred_check_branch
    %125 = sbr.rel (0) target = $region29
  $region28: #{my_model_forward.14} parent=0 // pred_region
    _
  $region29: #{my_model_forward.14} parent=0 // pred_fallthru
    _
  // Predicated region
  $region30: #{my_model_forward.14} parent=0 // pred_check
    _
  $region31: #{my_model_forward.14} parent=0 // pred_check_branch
    %127 = sbr.rel (0) target = $region33
  $region32: #{my_model_forward.14} parent=0 // pred_region
    _
  $region33: #{my_model_forward.14} parent=0 // pred_fallthru
    _

// kernel: my_model_forward.25
$region0: #{my_model_forward.25}
  #allocation0 [shape = 'u32[]', space=smem, size = 0x4, offset = 0x4, fixed_abs, tag = 'smem constant byte address 0x4 - core index']
  #allocation1 [shape = 'u32[72,128]{1,0:T(1,128)}', space=vmem, size = 0x9000, scoped, tag = 'internal scratch']
  %s0 = inlined_call_operand.vmem [shape: f32[16,32], index: 0, kind: input, shape index: {}]
  %s1 = inlined_call_operand.vmem [shape: f32[16,32], index: 1, kind: input, shape index: {}]
  %s2 = inlined_call_operand.vmem [shape: f32[16,32], index: 2, kind: input, shape index: {}]
  %s3 = inlined_call_operand.vmem [shape: f32[16,32], index: 3, kind: input, shape index: {}]
  %s4 = inlined_call_operand.vmem [shape: f32[128,2], index: 4, kind: input, shape index: {}]
  %s5 = inlined_call_operand.vmem [shape: f32[16,2], index: 5, kind: output, shape index: {}]
  %s6 = sld [smem:[#allocation0]]
  $region30: #{my_model_forward.25} parent=0
    _
  %s8 = ssub.s32 1, %s6
  %s9 = scalar_select 0, %s8, %s6
  // Predicated region
  $region2: #{my_model_forward.25} parent=0 // pred_check
    _
  $region3: #{my_model_forward.25} parent=0 // pred_check_branch
    %11 = sbr.rel (0) target = $region5
  $region4: #{my_model_forward.25} parent=0 // pred_region
    _
  $region5: #{my_model_forward.25} parent=0 // pred_fallthru
    _
  // Predicated region
  $region6: #{my_model_forward.25} parent=0 // pred_check
    _
  $region7: #{my_model_forward.25} parent=0 // pred_check_branch
    %13 = sbr.rel (0) target = $region9
  $region8: #{my_model_forward.25} parent=0 // pred_region
    _
  $region9: #{my_model_forward.25} parent=0 // pred_fallthru
    _
  // Predicated region
  $region10: #{my_model_forward.25} parent=0 // pred_check
    _
  $region11: #{my_model_forward.25} parent=0 // pred_check_branch
    %15 = sbr.rel (0) target = $region13
  $region12: #{my_model_forward.25} parent=0 // pred_region
    _
  $region13: #{my_model_forward.25} parent=0 // pred_fallthru
    _
  // Predicated region
  $region14: #{my_model_forward.25} parent=0 // pred_check
    _
  $region15: #{my_model_forward.25} parent=0 // pred_check_branch
    %17 = sbr.rel (0) target = $region17
  $region16: #{my_model_forward.25} parent=0 // pred_region
    _
  $region17: #{my_model_forward.25} parent=0 // pred_fallthru
    _
  // Predicated region
  $region18: #{my_model_forward.25} parent=0 // pred_check
    _
  $region19: #{my_model_forward.25} parent=0 // pred_check_branch
    %19 = sbr.rel (0) target = $region21
  $region20: #{my_model_forward.25} parent=0 // pred_region
    _
  $region21: #{my_model_forward.25} parent=0 // pred_fallthru
    _
  %v20 = vld [vmem:[%s0] sm:$0xff]
  %v21 = vld [vmem:[%s0 + $0x8] sm:$0xff]
  %v22 = vld [vmem:[%s1] sm:$0xff]
  %v23 = vld [vmem:[%s1 + $0x8] sm:$0xff]
  %v24 = vld [vmem:[%s2] sm:$0xff]
  %v25 = vld [vmem:[%s2 + $0x8] sm:$0xff]
  %v26 = vld [vmem:[%s3] sm:$0xff]
  %v27 = vld [vmem:[%s3 + $0x8] sm:$0xff]
  %30 = vrot.lane.b32.xlu0 %v22, 32
  %v31 = vpop.permute.xlu0 %30
  %32 = vrot.lane.b32.xlu0 %v23, 32
  %v33 = vpop.permute.xlu0 %32
  %38 = vrot.lane.b32.xlu0 %v24, 64
  %v39 = vpop.permute.xlu0 %38
  %40 = vrot.lane.b32.xlu0 %v25, 64
  %v41 = vpop.permute.xlu0 %40
  %46 = vrot.lane.b32.xlu0 %v26, 96
  %v47 = vpop.permute.xlu0 %46
  %48 = vrot.lane.b32.xlu0 %v27, 96
  %v49 = vpop.permute.xlu0 %48
  %vm52 = vcmask 261120
  %v53 = vsel %vm52, %v20, %v31
  %v54 = vsel %vm52, %v21, %v33
  %vm55 = vcmask 523264
  %v56 = vsel %vm55, %v53, %v39
  %v57 = vsel %vm55, %v54, %v41
  %vm58 = vcmask 785408
  %v59 = vsel %vm58, %v56, %v47
  %v60 = vsel %vm58, %v57, %v49
  %v61 = vpack.c.bf16 %v60, %v59
  %v62 = vld [vmem:[%s4] sm:$0xff]
  %v63 = vld [vmem:[%s4 + $0x8] sm:$0xff]
  %v64 = vld [vmem:[%s4 + $0x10] sm:$0xff]
  %v65 = vld [vmem:[%s4 + $0x18] sm:$0xff]
  %v66 = vld [vmem:[%s4 + $0x20] sm:$0xff]
  %v67 = vld [vmem:[%s4 + $0x28] sm:$0xff]
  %v68 = vld [vmem:[%s4 + $0x30] sm:$0xff]
  %v69 = vld [vmem:[%s4 + $0x38] sm:$0xff]
  %v70 = vld [vmem:[%s4 + $0x40] sm:$0xff]
  %v71 = vld [vmem:[%s4 + $0x48] sm:$0xff]
  %v72 = vld [vmem:[%s4 + $0x50] sm:$0xff]
  %v73 = vld [vmem:[%s4 + $0x58] sm:$0xff]
  %v74 = vld [vmem:[%s4 + $0x60] sm:$0xff]
  %v75 = vld [vmem:[%s4 + $0x68] sm:$0xff]
  %v76 = vld [vmem:[%s4 + $0x70] sm:$0xff]
  %v77 = vld [vmem:[%s4 + $0x78] sm:$0xff]
  %v78 = vpack.c.bf16 %v63, %v62
  %v79 = vpack.c.bf16 %v65, %v64
  %v80 = vpack.c.bf16 %v67, %v66
  %v81 = vpack.c.bf16 %v69, %v68
  %v82 = vpack.c.bf16 %v71, %v70
  %v83 = vpack.c.bf16 %v73, %v72
  %v84 = vpack.c.bf16 %v75, %v74
  %v85 = vpack.c.bf16 %v77, %v76
  %86 = vmatpush.bf16.msra.mxu0 %v85
  %87 = vmatpush.bf16.msra.mxu0 %v84
  %88 = vmatpush.bf16.msra.mxu0 %v83
  %89 = vmatpush.bf16.msra.mxu0 %v82
  %90 = vmatpush.bf16.msra.mxu0 %v81
  %91 = vmatpush.bf16.msra.mxu0 %v80
  %92 = vmatpush.bf16.msra.mxu0 %v79
  %93 = vmatpush.bf16.msra.mxu0 %v78
  %94 = vmatmul.bf16.gmra.mxu0 %v61
  %v95 = vpop.f32.mrf.mxu0
  %v96 = vadd.f32 0.0, %v95
  %v97 = vpop.f32.mrf.mxu0
  %v98 = vadd.f32 0.0, %v97
  %99 = vdwg.mxu0
  %vm100 = vcmask 15360
  %v101 = vsel %vm100, %v96, -inf
  %102 = vmax.xlane.f32.xlu0 %v101
  %v103 = vpop.xlane.xlu0 %102
  %v104 = vsel %vm100, %v98, -inf
  %105 = vmax.xlane.f32.xlu0 %v104
  %v106 = vpop.xlane.xlu0 %105
  %v107 = vsub.f32 %v96, %v103
  %v108 = vsub.f32 %v98, %v106
  %v109 = vmul.f32 %v107, 1.442695
  %v110 = vpow.pop %v109
  %v111 = vmul.f32 %v108, 1.442695
  %v112 = vpow.pop %v111
  %v113 = vsel %vm100, %v110, 0.0
  %114 = vadd.xlane.f32.xlu0 %v113
  %v115 = vpop.xlane.xlu0 %114
  %v116 = vsel %vm100, %v112, 0.0
  %117 = vadd.xlane.f32.xlu0 %v116
  %v118 = vpop.xlane.xlu0 %117
  %v119 = vrcp.pop %v115
  %v120 = vmul.f32 %v115, %v119
  %v121 = vsub.f32 1.0, %v120
  %v122 = vmul.f32 %v119, %v121
  %v123 = vadd.f32 %v119, %v122
  %vm124 = vweird.f32 %v115
  %vm125 = vweird.f32 %v119
  %vm126 = vmor %vm124, %vm125
  %v127 = vsel %vm126, %v119, %v123
  %v128 = vand.u32 2147483647, %v115
  %vm129 = vcmp.eq.f32.partialorder %v128, 8.507059e+37
  %v130 = vand.u32 %v115, 2147483648
  %v131 = vor.u32 1.1754944e-38, %v130
  %v132 = vsel %vm129, %v131, %v127
  %v133 = vmul.f32 %v110, %v132
  %v134 = vrcp.pop %v118
  %v135 = vmul.f32 %v118, %v134
  %v136 = vsub.f32 1.0, %v135
  %v137 = vmul.f32 %v134, %v136
  %v138 = vadd.f32 %v134, %v137
  %vm139 = vweird.f32 %v118
  %vm140 = vweird.f32 %v134
  %vm141 = vmor %vm139, %vm140
  %v142 = vsel %vm141, %v134, %v138
  %v143 = vand.u32 2147483647, %v118
  %vm144 = vcmp.eq.f32.partialorder %v143, 8.507059e+37
  %v145 = vand.u32 %v118, 2147483648
  %v146 = vor.u32 1.1754944e-38, %v145
  %v147 = vsel %vm144, %v146, %v142
  %v148 = vmul.f32 %v112, %v147
  %149 = vst.msk [vmem:[%s5] sm:$0xff] %vm100, %v133
  %150 = vst.msk [vmem:[%s5 + $0x8] sm:$0xff] %vm100, %v148
  // Predicated region
  $region22: #{my_model_forward.25} parent=0 // pred_check
    _
  $region23: #{my_model_forward.25} parent=0 // pred_check_branch
    %152 = sbr.rel (0) target = $region25
  $region24: #{my_model_forward.25} parent=0 // pred_region
    _
  $region25: #{my_model_forward.25} parent=0 // pred_fallthru
    _
  // Predicated region
  $region26: #{my_model_forward.25} parent=0 // pred_check
    _
  $region27: #{my_model_forward.25} parent=0 // pred_check_branch
    %154 = sbr.rel (0) target = $region29
  $region28: #{my_model_forward.25} parent=0 // pred_region
    _
  $region29: #{my_model_forward.25} parent=0 // pred_fallthru
    _

// kernel: my_model_forward.15
$region0: #{my_model_forward.15}
  #allocation0 [shape = 'u32[]', space=smem, size = 0x4, offset = 0x4, fixed_abs, tag = 'smem constant byte address 0x4 - core index']
  #allocation1 [shape = 'u32[72,128]{1,0:T(1,128)}', space=vmem, size = 0x9000, scoped, tag = 'internal scratch']
  %s0 = inlined_call_operand.vmem [shape: f32[16,32], index: 0, kind: input, shape index: {}]
  %s1 = inlined_call_operand.vmem [shape: f32[32,128], index: 1, kind: input, shape index: {}]
  %s2 = inlined_call_operand.vmem [shape: f32[1,128], index: 2, kind: input, shape index: {}]
  %s3 = inlined_call_operand.vmem [shape: f32[128,32], index: 3, kind: input, shape index: {}]
  %s4 = inlined_call_operand.vmem [shape: f32[1,32], index: 4, kind: input, shape index: {}, may-alias: {4,6}]
  %s5 = inlined_call_operand.vmem [shape: f32[1,32], index: 5, kind: input, shape index: {}]
  %s6 = inlined_call_operand.vmem [shape: f32[1,32], index: 6, kind: input, shape index: {}, may-alias: {4,6}]
  %s7 = inlined_call_operand.vmem [shape: f32[16,32], index: 7, kind: output, shape index: {}]
  %s8 = sld [smem:[#allocation0]]
  $region38: #{my_model_forward.15} parent=0
    _
  %s10 = ssub.s32 1, %s8
  %s11 = scalar_select 0, %s10, %s8
  // Predicated region
  $region2: #{my_model_forward.15} parent=0 // pred_check
    _
  $region3: #{my_model_forward.15} parent=0 // pred_check_branch
    %13 = sbr.rel (0) target = $region5
  $region4: #{my_model_forward.15} parent=0 // pred_region
    _
  $region5: #{my_model_forward.15} parent=0 // pred_fallthru
    _
  // Predicated region
  $region6: #{my_model_forward.15} parent=0 // pred_check
    _
  $region7: #{my_model_forward.15} parent=0 // pred_check_branch
    %15 = sbr.rel (0) target = $region9
  $region8: #{my_model_forward.15} parent=0 // pred_region
    _
  $region9: #{my_model_forward.15} parent=0 // pred_fallthru
    _
  // Predicated region
  $region10: #{my_model_forward.15} parent=0 // pred_check
    _
  $region11: #{my_model_forward.15} parent=0 // pred_check_branch
    %17 = sbr.rel (0) target = $region13
  $region12: #{my_model_forward.15} parent=0 // pred_region
    _
  $region13: #{my_model_forward.15} parent=0 // pred_fallthru
    _
  // Predicated region
  $region14: #{my_model_forward.15} parent=0 // pred_check
    _
  $region15: #{my_model_forward.15} parent=0 // pred_check_branch
    %19 = sbr.rel (0) target = $region17
  $region16: #{my_model_forward.15} parent=0 // pred_region
    _
  $region17: #{my_model_forward.15} parent=0 // pred_fallthru
    _
  // Predicated region
  $region18: #{my_model_forward.15} parent=0 // pred_check
    _
  $region19: #{my_model_forward.15} parent=0 // pred_check_branch
    %21 = sbr.rel (0) target = $region21
  $region20: #{my_model_forward.15} parent=0 // pred_region
    _
  $region21: #{my_model_forward.15} parent=0 // pred_fallthru
    _
  // Predicated region
  $region22: #{my_model_forward.15} parent=0 // pred_check
    _
  $region23: #{my_model_forward.15} parent=0 // pred_check_branch
    %23 = sbr.rel (0) target = $region25
  $region24: #{my_model_forward.15} parent=0 // pred_region
    _
  $region25: #{my_model_forward.15} parent=0 // pred_fallthru
    _
  // Predicated region
  $region26: #{my_model_forward.15} parent=0 // pred_check
    _
  $region27: #{my_model_forward.15} parent=0 // pred_check_branch
    %25 = sbr.rel (0) target = $region29
  $region28: #{my_model_forward.15} parent=0 // pred_region
    _
  $region29: #{my_model_forward.15} parent=0 // pred_fallthru
    _
  %v27 = vld [vmem:[%s0] sm:$0xff]
  %v28 = vld [vmem:[%s0 + $0x8] sm:$0xff]
  %v29 = vpack.c.bf16 %v28, %v27
  %v30 = vld [vmem:[%s1] sm:$0xff]
  %v31 = vld [vmem:[%s1 + $0x8] sm:$0xff]
  %v32 = vld [vmem:[%s1 + $0x10] sm:$0xff]
  %v33 = vld [vmem:[%s1 + $0x18] sm:$0xff]
  %v34 = vpack.c.bf16 %v31, %v30
  %v35 = vpack.c.bf16 %v33, %v32
  %v36 = vld [vmem:[%s2] sm:$0x1]
  %v38 = vperm.slane %v36, 0
  %vm40 = vcmask 261120
  %v42 = vsel %vm40, %v29, 0
  %44 = vmatpush.bf16.msra.mxu0 0
  %45 = vmatpush.bf16.msra.mxu0 0
  %46 = vmatpush.bf16.msra.mxu0 0
  %47 = vmatpush.bf16.msra.mxu0 0
  %48 = vmatpush.bf16.msra.mxu0 0
  %49 = vmatpush.bf16.msra.mxu0 0
  %50 = vmatpush.bf16.msra.mxu0 %v35
  %51 = vmatpush.bf16.msra.mxu0 %v34
  %52 = vmatmul.bf16.gmra.mxu0 %v42
  %v53 = vpop.f32.mrf.mxu0
  %v54 = vadd.f32 %v38, %v53
  %v55 = vpop.f32.mrf.mxu0
  %v56 = vadd.f32 %v38, %v55
  %57 = vdwg.mxu0
  %v58 = vmul.f32 %v54, 0.5
  %v59 = vmul.f32 %v56, 0.5
  %v60 = vmul.f32 %v54, 0.044715
  %v61 = vmul.f32 %v56, 0.044715
  %v62 = vmul.f32 %v60, %v54
  %v63 = vmul.f32 %v61, %v56
  %v64 = vmul.f32 %v62, %v54
  %v65 = vmul.f32 %v63, %v56
  %v66 = vadd.f32 %v54, %v64
  %v67 = vadd.f32 %v56, %v65
  %v68 = vmul.f32 %v66, 0.7978846
  %v69 = vmul.f32 %v67, 0.7978846
  %v70 = vtanh.pop %v68
  %v71 = vtanh.pop %v69
  %v72 = vadd.f32 %v70, 1.0
  %v73 = vadd.f32 %v71, 1.0
  %v74 = vmul.f32 %v58, %v72
  %v75 = vmul.f32 %v59, %v73
  %v76 = vpack.c.bf16 %v75, %v74
  %v77 = vld [vmem:[%s3] sm:$0xff]
  %v78 = vld [vmem:[%s3 + $0x8] sm:$0xff]
  %v79 = vld [vmem:[%s3 + $0x10] sm:$0xff]
  %v80 = vld [vmem:[%s3 + $0x18] sm:$0xff]
  %v81 = vld [vmem:[%s3 + $0x20] sm:$0xff]
  %v82 = vld [vmem:[%s3 + $0x28] sm:$0xff]
  %v83 = vld [vmem:[%s3 + $0x30] sm:$0xff]
  %v84 = vld [vmem:[%s3 + $0x38] sm:$0xff]
  %v85 = vld [vmem:[%s3 + $0x40] sm:$0xff]
  %v86 = vld [vmem:[%s3 + $0x48] sm:$0xff]
  %v87 = vld [vmem:[%s3 + $0x50] sm:$0xff]
  %v88 = vld [vmem:[%s3 + $0x58] sm:$0xff]
  %v89 = vld [vmem:[%s3 + $0x60] sm:$0xff]
  %v90 = vld [vmem:[%s3 + $0x68] sm:$0xff]
  %v91 = vld [vmem:[%s3 + $0x70] sm:$0xff]
  %v92 = vld [vmem:[%s3 + $0x78] sm:$0xff]
  %v93 = vpack.c.bf16 %v78, %v77
  %v94 = vpack.c.bf16 %v80, %v79
  %v95 = vpack.c.bf16 %v82, %v81
  %v96 = vpack.c.bf16 %v84, %v83
  %v97 = vpack.c.bf16 %v86, %v85
  %v98 = vpack.c.bf16 %v88, %v87
  %v99 = vpack.c.bf16 %v90, %v89
  %v100 = vpack.c.bf16 %v92, %v91
  %v101 = vld [vmem:[%s4] sm:$0x1]
  %v103 = vperm.slane %v101, 0
  %105 = vmatpush.bf16.msra.mxu0 %v100
  %106 = vmatpush.bf16.msra.mxu0 %v99
  %107 = vmatpush.bf16.msra.mxu0 %v98
  %108 = vmatpush.bf16.msra.mxu0 %v97
  %109 = vmatpush.bf16.msra.mxu0 %v96
  %110 = vmatpush.bf16.msra.mxu0 %v95
  %111 = vmatpush.bf16.msra.mxu0 %v94
  %112 = vmatpush.bf16.msra.mxu0 %v93
  %113 = vmatmul.bf16.gmra.mxu0 %v76
  %v114 = vpop.f32.mrf.mxu0
  %v115 = vadd.f32 %v103, %v114
  %v116 = vpop.f32.mrf.mxu0
  %v117 = vadd.f32 %v103, %v116
  %118 = vdwg.mxu0
  %v119 = vadd.f32 %v27, %v115
  %v120 = vadd.f32 %v28, %v117
  %v121 = vld [vmem:[%s5] sm:$0x1]
  %v122 = vld [vmem:[%s6] sm:$0x1]
  %v123 = vsel %vm40, %v119, 0.0
  %124 = vadd.xlane.f32.xlu0 %v123
  %v125 = vpop.xlane.xlu0 %124
  %v126 = vsel %vm40, %v120, 0.0
  %127 = vadd.xlane.f32.xlu0 %v126
  %v128 = vpop.xlane.xlu0 %127
  %v129 = vrcp.pop 32.0
  %v130 = vmul.f32 32.0, %v129
  %v131 = vsub.f32 1.0, %v130
  %v132 = vmul.f32 %v129, %v131
  %v133 = vadd.f32 %v129, %v132
  %vm134 = vweird.f32 %v129
  %v135 = vsel %vm134, %v129, %v133
  %v136 = vmul.f32 %v125, %v135
  %v137 = vmul.f32 %v128, %v135
  %v138 = vsub.f32 %v119, %v136
  %v139 = vsub.f32 %v120, %v137
  %v140 = vmul.f32 %v138, %v138
  %v141 = vmul.f32 %v139, %v139
  %v142 = vsel %vm40, %v140, 0.0
  %143 = vadd.xlane.f32.xlu0 %v142
  %v144 = vpop.xlane.xlu0 %143
  %v145 = vsel %vm40, %v141, 0.0
  %146 = vadd.xlane.f32.xlu0 %v145
  %v147 = vpop.xlane.xlu0 %146
  %v148 = vmul.f32 %v144, %v135
  %v149 = vmul.f32 %v147, %v135
  %v150 = vadd.f32 %v148, 1e-12
  %v151 = vadd.f32 %v149, 1e-12
  %v152 = vrsqrt.pop %v150
  %v153 = vmul.f32 %v152, %v150
  %v154 = vmul.f32 %v153, %v152
  %v155 = vmul.f32 0.5, %v154
  %v156 = vsub.f32 1.5, %v155
  %v157 = vmul.f32 %v152, %v156
  %vm158 = vweird.f32 %v150
  %vm159 = vweird.f32 %v152
  %vm160 = vmor %vm158, %vm159
  %v161 = vsel %vm160, %v152, %v157
  %v162 = vrsqrt.pop %v151
  %v163 = vmul.f32 %v162, %v151
  %v164 = vmul.f32 %v163, %v162
  %v165 = vmul.f32 0.5, %v164
  %v166 = vsub.f32 1.5, %v165
  %v167 = vmul.f32 %v162, %v166
  %vm168 = vweird.f32 %v151
  %vm169 = vweird.f32 %v162
  %vm170 = vmor %vm168, %vm169
  %v171 = vsel %vm170, %v162, %v167
  %v172 = vmul.f32 %v138, %v161
  %v173 = vmul.f32 %v139, %v171
  %v175 = vperm.slane %v121, 0
  %v177 = vmul.f32 %v172, %v175
  %v178 = vmul.f32 %v173, %v175
  %v180 = vperm.slane %v122, 0
  %v182 = vadd.f32 %v177, %v180
  %v183 = vadd.f32 %v178, %v180
  %184 = vst.msk [vmem:[%s7] sm:$0xff] %vm40, %v182
  %185 = vst.msk [vmem:[%s7 + $0x8] sm:$0xff] %vm40, %v183
  // Predicated region
  $region30: #{my_model_forward.15} parent=0 // pred_check
    _
  $region31: #{my_model_forward.15} parent=0 // pred_check_branch
    %187 = sbr.rel (0) target = $region33
  $region32: #{my_model_forward.15} parent=0 // pred_region
    _
  $region33: #{my_model_forward.15} parent=0 // pred_fallthru
    _
  // Predicated region
  $region34: #{my_model_forward.15} parent=0 // pred_check
    _
  $region35: #{my_model_forward.15} parent=0 // pred_check_branch
    %189 = sbr.rel (0) target = $region37
  $region36: #{my_model_forward.15} parent=0 // pred_region
    _
  $region37: #{my_model_forward.15} parent=0 // pred_fallthru
    _

</llo_original>
